<compile_context>
chip_gen: v6e
topology: v6e:2x2x1
jax: 0.10.0
libtpu: 0.0.40
codegen_flags: <defaults>
</compile_context>

<pallas_src>
import functools

import jax
import jax.numpy as jnp
from jax import lax
from jax.experimental import pallas as pl
from jax.experimental.pallas import tpu as pltpu

K_SPA = 7          # spatial-attention conv kernel size
PAD_SPA = K_SPA // 2


def build_spa_toeplitz(w_spa, H, W):
    """Im2col/Toeplitz matrix M (2*H*W, H*W) such that, for am of shape (2, H, W),
    conv2d_same_7x7(am, w_spa).reshape(H*W) == am.reshape(2*H*W) @ M
    (cross-correlation, zero padding, matching nn.Conv2d / lax.conv)."""
    HW = H * W
    w = w_spa.reshape(2, K_SPA, K_SPA).astype(jnp.float32)
    ki = jnp.arange(K_SPA).reshape(K_SPA, 1, 1, 1)
    kj = jnp.arange(K_SPA).reshape(1, K_SPA, 1, 1)
    ph = jnp.arange(H).reshape(1, 1, H, 1)
    pw = jnp.arange(W).reshape(1, 1, 1, W)
    ih = ph + ki - PAD_SPA                 # input row read by tap (ki,kj) for output (ph,pw)
    iw = pw + kj - PAD_SPA
    valid = (ih >= 0) & (ih < H) & (iw >= 0) & (iw < W)          # zero padding
    q = (jnp.clip(ih, 0, H - 1) * W + jnp.clip(iw, 0, W - 1)).reshape(-1)   # input flat idx
    p = jnp.broadcast_to(ph * W + pw, (K_SPA, K_SPA, H, W)).reshape(-1)     # output flat idx
    rows = []
    for c in range(2):
        vals = (w[c][:, :, None, None] * valid.astype(jnp.float32)).reshape(-1)
        # .add (not .set): out-of-bounds taps are clipped onto valid positions but
        # carry value 0, so duplicate indices only ever add zero.
        rows.append(jnp.zeros((HW, HW), jnp.float32).at[q, p].add(vals))
    return jnp.concatenate(rows, axis=0)   # (2*HW, HW), rows ordered [c][ih][iw]


def gap_kernel(x_ref, m_ref, bspa_ref, w1t_ref, b1_ref, w2_ref, b2_ref, o_ref,
               *, N, C):
    # x_ref: (N*C, HW) lane-dense block for the whole batch (single grid step).
    x = x_ref[...]                                    # (N*C, HW) f32

    # ---------------- spatial attention (CBAM-style) ----------------
    # Channel mean / max per batch element (sublane reductions), then one MXU
    # matmul against the host-built Toeplitz matrix for the whole batch.
    am_rows = []
    for n in range(N):                                # N=2: tiny static loop
        xb = x[n * C:(n + 1) * C, :]                  # (C, HW)
        avg = jnp.mean(xb, axis=0, keepdims=True)     # (1, HW)
        mx = jnp.max(xb, axis=0, keepdims=True)       # (1, HW)
        am_rows.append(jnp.concatenate([avg, mx], axis=1))   # (1, 2*HW)
    am = jnp.concatenate(am_rows, axis=0)             # (N, 2*HW)
    conv = jnp.dot(am, m_ref[...],
                   preferred_element_type=jnp.float32)        # (N, HW) on the MXU
    att_spa = jax.nn.sigmoid(conv + bspa_ref[0])      # (N, HW), already lane-dense

    # ---------------- channel attention (SE-style), VPU-only ----------------
    pooled = jnp.mean(x, axis=1, keepdims=True)       # (N*C, 1) global avg pool
    w1t = w1t_ref[...]                                # (C, hidden)  == w1.T
    w2 = w2_ref[...]                                  # (C, hidden)
    b1 = b1_ref[...]                                  # (1, hidden)
    b2 = b2_ref[...]                                  # (C, 1)

    # ---------------- fused gate + residual + ReLU ---------------------------
    # relu(x*att_spa + x*s + x) == relu(x * (1 + att_spa + s))
    gates = []
    for n in range(N):
        p_col = pooled[n * C:(n + 1) * C, :]          # (C, 1)
        # hdn[i] = relu(b1[i] + sum_j w1[i,j] * p[j])  -> sublane reduce
        hdn = jnp.maximum(jnp.sum(w1t * p_col, axis=0, keepdims=True) + b1, 0.0)   # (1, hidden)
        # s[c] = sigmoid(b2[c] + sum_i w2[c,i] * hdn[i]) -> lane reduce
        s_col = jax.nn.sigmoid(jnp.sum(w2 * hdn, axis=1, keepdims=True) + b2)      # (C, 1)
        gates.append(1.0 + att_spa[n:n + 1, :] + s_col)        # (C, HW)
    gate = jnp.concatenate(gates, axis=0)             # (N*C, HW)

    # Single full-block, full-lane (256-wide) store.
    o_ref[...] = jnp.maximum(x * gate, 0.0).astype(o_ref.dtype)


def gap_pallas(x, w_spa, b_spa, w1, b1, w2, b2):
    N, C, H, W = x.shape
    hidden = w1.shape[0]
    HW = H * W

    x_flat = x.reshape(N * C, HW)                 # lane-dense, exact-sublane packing
    M = build_spa_toeplitz(w_spa, H, W)           # (2*HW, HW) f32, ~512 KiB
    w1t = w1.T                                    # (C, hidden): avoids in-kernel transposes
    b1_row = b1.reshape(1, hidden)
    b2_col = b2.reshape(C, 1)
    b_spa_vec = b_spa.reshape(1)

    kernel = functools.partial(gap_kernel, N=N, C=C)

    out_flat = pl.pallas_call(
        kernel,
        out_shape=jax.ShapeDtypeStruct((N * C, HW), x.dtype),
        grid=(1,),                                # whole batch in one step (single-TC friendly)
        in_specs=[
            pl.BlockSpec((N * C, HW), lambda i: (0, 0)),             # x (lane-dense)
            pl.BlockSpec((2 * HW, HW), lambda i: (0, 0)),            # Toeplitz conv matrix
            pl.BlockSpec(memory_space=pltpu.MemorySpace.SMEM),       # b_spa scalar
            pl.BlockSpec((C, hidden), lambda i: (0, 0)),             # w1.T
            pl.BlockSpec((1, hidden), lambda i: (0, 0)),             # b1
            pl.BlockSpec((C, hidden), lambda i: (0, 0)),             # w2
            pl.BlockSpec((C, 1), lambda i: (0, 0)),                  # b2
        ],
        out_specs=pl.BlockSpec((N * C, HW), lambda i: (0, 0)),
        compiler_params=pltpu.CompilerParams(dimension_semantics=("arbitrary",)),
    )(x_flat, M, b_spa_vec, w1t, b1_row, w2, b2_col)

    return out_flat.reshape(N, C, H, W)


def gap_ref(x, w_spa, b_spa, w1, b1, w2, b2):
    """Pure-JAX reference (same math, written independently)."""
    avg_c = jnp.mean(x, axis=1, keepdims=True)
    max_c = jnp.max(x, axis=1, keepdims=True)
    m = jnp.concatenate([avg_c, max_c], axis=1)                     # (N, 2, H, W)
    conv = lax.conv_general_dilated(
        m, w_spa, window_strides=(1, 1), padding=[(PAD_SPA, PAD_SPA)] * 2,
        dimension_numbers=("NCHW", "OIHW", "NCHW"),
        precision=lax.Precision.HIGHEST)
    att_spa = jax.nn.sigmoid(conv + b_spa.reshape(1, 1, 1, 1))      # (N, 1, H, W)
    x2 = x * att_spa

    pooled = jnp.mean(x, axis=(2, 3))                               # (N, C)
    h = jnp.maximum(pooled @ w1.T + b1[None, :], 0.0)               # (N, hidden)
    s = jax.nn.sigmoid(h @ w2.T + b2[None, :])                      # (N, C)
    x3 = x * s[:, :, None, None]

    return jnp.maximum(x2 + x3 + x, 0.0)


if __name__ == "__main__":
    N, C, H, W = 2, 4, 16, 16      # in_ch == out_ch so the residual add is valid
    hidden = C

    key = jax.random.PRNGKey(0)
    ks = jax.random.split(key, 7)
    x = jax.random.normal(ks[0], (N, C, H, W), jnp.float32)
    # Deterministic synthetic parameters (no checkpoint loading).
    w_spa = jax.random.normal(ks[1], (1, 2, K_SPA, K_SPA), jnp.float32) * 0.1
    b_spa = jax.random.normal(ks[2], (1,), jnp.float32) * 0.1
    w1 = jax.random.normal(ks[3], (hidden, C), jnp.float32) * 0.3
    b1 = jax.random.normal(ks[4], (hidden,), jnp.float32) * 0.1
    w2 = jax.random.normal(ks[5], (C, hidden), jnp.float32) * 0.3
    b2 = jax.random.normal(ks[6], (C,), jnp.float32) * 0.1

    out = gap_pallas(x, w_spa, b_spa, w1, b1, w2, b2)
    out = jax.block_until_ready(out)

    ref = gap_ref(x, w_spa, b_spa, w1, b1, w2, b2)
    err = float(jnp.max(jnp.abs(out - ref)))
    assert jnp.allclose(out, ref, atol=2e-3, rtol=2e-3), f"max abs err = {err}"
    print("KERNEL_OK")
</pallas_src>

<mosaic_0001>
module attributes {stable_mosaic.version = 11 : i64} {
  func.func @gap_kernel(%arg0: i32, %arg1: memref<8x256xf32, #tpu.memory_space<vmem>>, %arg2: memref<512x256xf32, #tpu.memory_space<vmem>>, %arg3: memref<1xf32, #tpu.memory_space<smem>>, %arg4: memref<4x4xf32, #tpu.memory_space<vmem>>, %arg5: memref<1x4xf32, #tpu.memory_space<vmem>>, %arg6: memref<4x4xf32, #tpu.memory_space<vmem>>, %arg7: memref<4x1xf32, #tpu.memory_space<vmem>>, %arg8: memref<8x256xf32, #tpu.memory_space<vmem>>) attributes {dimension_semantics = [#tpu.dimension_semantics<arbitrary>], iteration_bounds = array<i64: 1>, scalar_prefetch = 0 : i64, scratch_operands = 0 : i64, tpu.core_type = #tpu.core_type<tc>, window_params = [{pipeline_mode = #tpu.pipeline_mode<synchronous>, transform_indices = @transform_0, window_bounds = array<i64: 8, 256>}, {pipeline_mode = #tpu.pipeline_mode<synchronous>, transform_indices = @transform_1, window_bounds = array<i64: 512, 256>}, {transform_indices = @transform_2, window_bounds = array<i64: 1>}, {pipeline_mode = #tpu.pipeline_mode<synchronous>, transform_indices = @transform_3, window_bounds = array<i64: 4, 4>}, {pipeline_mode = #tpu.pipeline_mode<synchronous>, transform_indices = @transform_4, window_bounds = array<i64: 1, 4>}, {pipeline_mode = #tpu.pipeline_mode<synchronous>, transform_indices = @transform_5, window_bounds = array<i64: 4, 4>}, {pipeline_mode = #tpu.pipeline_mode<synchronous>, transform_indices = @transform_6, window_bounds = array<i64: 4, 1>}, {pipeline_mode = #tpu.pipeline_mode<synchronous>, transform_indices = @transform_7, window_bounds = array<i64: 8, 256>}]} {
    %c0 = arith.constant 0 : index
    %c0_0 = arith.constant 0 : index
    %0 = vector.load %arg1[%c0, %c0_0] : memref<8x256xf32, #tpu.memory_space<vmem>>, vector<8x256xf32>
    %1 = vector.extract_strided_slice %0 {offsets = [0, 0], sizes = [4, 256], strides = [1, 1]} : vector<8x256xf32> to vector<4x256xf32>
    %cst = arith.constant dense<0.000000e+00> : vector<256xf32>
    %2 = vector.multi_reduction <add>, %1, %cst [0] : vector<4x256xf32> to vector<256xf32>
    %3 = vector.shape_cast %2 : vector<256xf32> to vector<1x256xf32>
    %cst_1 = arith.constant 4.000000e+00 : f32
    %4 = vector.broadcast %cst_1 : f32 to vector<1x256xf32>
    %5 = arith.divf %3, %4 : vector<1x256xf32>
    %cst_2 = arith.constant dense<0xFF800000> : vector<256xf32>
    %6 = vector.multi_reduction <maximumf>, %1, %cst_2 [0] : vector<4x256xf32> to vector<256xf32>
    %7 = vector.shape_cast %6 : vector<256xf32> to vector<1x256xf32>
    %8 = tpu.concatenate %5, %7 in 1 : vector<1x256xf32>, vector<1x256xf32> -> vector<1x512xf32>
    %9 = vector.extract_strided_slice %0 {offsets = [4, 0], sizes = [4, 256], strides = [1, 1]} : vector<8x256xf32> to vector<4x256xf32>
    %cst_3 = arith.constant dense<0.000000e+00> : vector<256xf32>
    %10 = vector.multi_reduction <add>, %9, %cst_3 [0] : vector<4x256xf32> to vector<256xf32>
    %11 = vector.shape_cast %10 : vector<256xf32> to vector<1x256xf32>
    %cst_4 = arith.constant 4.000000e+00 : f32
    %12 = vector.broadcast %cst_4 : f32 to vector<1x256xf32>
    %13 = arith.divf %11, %12 : vector<1x256xf32>
    %cst_5 = arith.constant dense<0xFF800000> : vector<256xf32>
    %14 = vector.multi_reduction <maximumf>, %9, %cst_5 [0] : vector<4x256xf32> to vector<256xf32>
    %15 = vector.shape_cast %14 : vector<256xf32> to vector<1x256xf32>
    %16 = tpu.concatenate %13, %15 in 1 : vector<1x256xf32>, vector<1x256xf32> -> vector<1x512xf32>
    %17 = tpu.concatenate %8, %16 in 0 : vector<1x512xf32>, vector<1x512xf32> -> vector<2x512xf32>
    %c0_6 = arith.constant 0 : index
    %c0_7 = arith.constant 0 : index
    %18 = vector.load %arg2[%c0_6, %c0_7] : memref<512x256xf32, #tpu.memory_space<vmem>>, vector<512x256xf32>
    %cst_8 = arith.constant dense<0.000000e+00> : vector<2x256xf32>
    %19 = tpu.matmul %17, %18, %cst_8 {dimension_numbers = #tpu.dot_dimension_numbers<[1], [0], [0], [1], [0, 0, 1, 1], [], []>} : vector<2x512xf32>, vector<512x256xf32>, vector<2x256xf32> -> vector<2x256xf32>
    %c0_9 = arith.constant 0 : index
    %20 = memref.load %arg3[%c0_9] : memref<1xf32, #tpu.memory_space<smem>>
    %21 = vector.broadcast %20 : f32 to vector<2x256xf32>
    %22 = arith.addf %19, %21 : vector<2x256xf32>
    %23 = arith.negf %22 : vector<2x256xf32>
    %24 = math.exp %23 : vector<2x256xf32>
    %cst_10 = arith.constant 1.000000e+00 : f32
    %25 = vector.broadcast %cst_10 : f32 to vector<2x256xf32>
    %26 = arith.addf %25, %24 : vector<2x256xf32>
    %27 = arith.divf %25, %26 : vector<2x256xf32>
    %cst_11 = arith.constant dense<0.000000e+00> : vector<8xf32>
    %28 = vector.multi_reduction <add>, %0, %cst_11 [1] : vector<8x256xf32> to vector<8xf32>
    %29 = vector.shape_cast %28 : vector<8xf32> to vector<8x1xf32>
    %cst_12 = arith.constant 2.560000e+02 : f32
    %30 = vector.broadcast %cst_12 : f32 to vector<8x1xf32>
    %31 = arith.divf %29, %30 : vector<8x1xf32>
    %c0_13 = arith.constant 0 : index
    %c0_14 = arith.constant 0 : index
    %32 = vector.load %arg4[%c0_13, %c0_14] : memref<4x4xf32, #tpu.memory_space<vmem>>, vector<4x4xf32>
    %c0_15 = arith.constant 0 : index
    %c0_16 = arith.constant 0 : index
    %33 = vector.load %arg6[%c0_15, %c0_16] : memref<4x4xf32, #tpu.memory_space<vmem>>, vector<4x4xf32>
    %c0_17 = arith.constant 0 : index
    %c0_18 = arith.constant 0 : index
    %34 = vector.load %arg5[%c0_17, %c0_18] : memref<1x4xf32, #tpu.memory_space<vmem>>, vector<1x4xf32>
    %c0_19 = arith.constant 0 : index
    %c0_20 = arith.constant 0 : index
    %35 = vector.load %arg7[%c0_19, %c0_20] : memref<4x1xf32, #tpu.memory_space<vmem>>, vector<4x1xf32>
    %36 = vector.extract_strided_slice %31 {offsets = [0, 0], sizes = [4, 1], strides = [1, 1]} : vector<8x1xf32> to vector<4x1xf32>
    %37 = vector.broadcast %36 : vector<4x1xf32> to vector<4x4xf32>
    %38 = arith.mulf %32, %37 : vector<4x4xf32>
    %cst_21 = arith.constant dense<0.000000e+00> : vector<4xf32>
    %39 = vector.multi_reduction <add>, %38, %cst_21 [0] : vector<4x4xf32> to vector<4xf32>
    %40 = vector.shape_cast %39 : vector<4xf32> to vector<1x4xf32>
    %41 = arith.addf %40, %34 : vector<1x4xf32>
    %cst_22 = arith.constant 0.000000e+00 : f32
    %42 = vector.broadcast %cst_22 : f32 to vector<1x4xf32>
    %43 = arith.maximumf %41, %42 : vector<1x4xf32>
    %44 = vector.broadcast %43 : vector<1x4xf32> to vector<4x4xf32>
    %45 = arith.mulf %33, %44 : vector<4x4xf32>
    %cst_23 = arith.constant dense<0.000000e+00> : vector<4xf32>
    %46 = vector.multi_reduction <add>, %45, %cst_23 [1] : vector<4x4xf32> to vector<4xf32>
    %47 = vector.shape_cast %46 : vector<4xf32> to vector<4x1xf32>
    %48 = arith.addf %47, %35 : vector<4x1xf32>
    %49 = arith.negf %48 : vector<4x1xf32>
    %50 = math.exp %49 : vector<4x1xf32>
    %cst_24 = arith.constant 1.000000e+00 : f32
    %51 = vector.broadcast %cst_24 : f32 to vector<4x1xf32>
    %52 = arith.addf %51, %50 : vector<4x1xf32>
    %53 = arith.divf %51, %52 : vector<4x1xf32>
    %54 = vector.extract_strided_slice %27 {offsets = [0, 0], sizes = [1, 256], strides = [1, 1]} : vector<2x256xf32> to vector<1x256xf32>
    %cst_25 = arith.constant 1.000000e+00 : f32
    %55 = vector.broadcast %cst_25 : f32 to vector<1x256xf32>
    %56 = arith.addf %55, %54 : vector<1x256xf32>
    %57 = vector.broadcast %56 : vector<1x256xf32> to vector<4x256xf32>
    %58 = vector.broadcast %53 : vector<4x1xf32> to vector<4x256xf32>
    %59 = arith.addf %57, %58 : vector<4x256xf32>
    %60 = vector.extract_strided_slice %31 {offsets = [4, 0], sizes = [4, 1], strides = [1, 1]} : vector<8x1xf32> to vector<4x1xf32>
    %61 = vector.broadcast %60 : vector<4x1xf32> to vector<4x4xf32>
    %62 = arith.mulf %32, %61 : vector<4x4xf32>
    %cst_26 = arith.constant dense<0.000000e+00> : vector<4xf32>
    %63 = vector.multi_reduction <add>, %62, %cst_26 [0] : vector<4x4xf32> to vector<4xf32>
    %64 = vector.shape_cast %63 : vector<4xf32> to vector<1x4xf32>
    %65 = arith.addf %64, %34 : vector<1x4xf32>
    %cst_27 = arith.constant 0.000000e+00 : f32
    %66 = vector.broadcast %cst_27 : f32 to vector<1x4xf32>
    %67 = arith.maximumf %65, %66 : vector<1x4xf32>
    %68 = vector.broadcast %67 : vector<1x4xf32> to vector<4x4xf32>
    %69 = arith.mulf %33, %68 : vector<4x4xf32>
    %cst_28 = arith.constant dense<0.000000e+00> : vector<4xf32>
    %70 = vector.multi_reduction <add>, %69, %cst_28 [1] : vector<4x4xf32> to vector<4xf32>
    %71 = vector.shape_cast %70 : vector<4xf32> to vector<4x1xf32>
    %72 = arith.addf %71, %35 : vector<4x1xf32>
    %73 = arith.negf %72 : vector<4x1xf32>
    %74 = math.exp %73 : vector<4x1xf32>
    %cst_29 = arith.constant 1.000000e+00 : f32
    %75 = vector.broadcast %cst_29 : f32 to vector<4x1xf32>
    %76 = arith.addf %75, %74 : vector<4x1xf32>
    %77 = arith.divf %75, %76 : vector<4x1xf32>
    %78 = vector.extract_strided_slice %27 {offsets = [1, 0], sizes = [1, 256], strides = [1, 1]} : vector<2x256xf32> to vector<1x256xf32>
    %cst_30 = arith.constant 1.000000e+00 : f32
    %79 = vector.broadcast %cst_30 : f32 to vector<1x256xf32>
    %80 = arith.addf %79, %78 : vector<1x256xf32>
    %81 = vector.broadcast %80 : vector<1x256xf32> to vector<4x256xf32>
    %82 = vector.broadcast %77 : vector<4x1xf32> to vector<4x256xf32>
    %83 = arith.addf %81, %82 : vector<4x256xf32>
    %84 = tpu.concatenate %59, %83 in 0 : vector<4x256xf32>, vector<4x256xf32> -> vector<8x256xf32>
    %85 = arith.mulf %0, %84 : vector<8x256xf32>
    %cst_31 = arith.constant 0.000000e+00 : f32
    %86 = vector.broadcast %cst_31 : f32 to vector<8x256xf32>
    %87 = arith.maximumf %85, %86 : vector<8x256xf32>
    %c0_32 = arith.constant 0 : index
    %c0_33 = arith.constant 0 : index
    %88 = vector.load %arg8[%c0_32, %c0_33] : memref<8x256xf32, #tpu.memory_space<vmem>>, vector<8x256xf32>
    tpu.vector_store %arg8[%c0_32, %c0_33], %87 {strides = array<i32>} : memref<8x256xf32, #tpu.memory_space<vmem>>, vector<8x256xf32>,
    return
  }
  func.func @transform_0(%arg0: i32) -> (i32, i32) {
    %c0_i32 = arith.constant 0 : i32
    %c0_i32_0 = arith.constant 0 : i32
    %c0_i32_1 = arith.constant 0 : i32
    return %c0_i32, %c0_i32_0 : i32, i32
  }
  func.func @transform_1(%arg0: i32) -> (i32, i32) {
    %c0_i32 = arith.constant 0 : i32
    %c0_i32_0 = arith.constant 0 : i32
    %c0_i32_1 = arith.constant 0 : i32
    return %c0_i32, %c0_i32_0 : i32, i32
  }
  func.func @transform_2(%arg0: i32) -> i32 {
    %c0_i32 = arith.constant 0 : i32
    %c0_i32_0 = arith.constant 0 : i32
    return %c0_i32 : i32
  }
  func.func @transform_3(%arg0: i32) -> (i32, i32) {
    %c0_i32 = arith.constant 0 : i32
    %c0_i32_0 = arith.constant 0 : i32
    %c0_i32_1 = arith.constant 0 : i32
    return %c0_i32, %c0_i32_0 : i32, i32
  }
  func.func @transform_4(%arg0: i32) -> (i32, i32) {
    %c0_i32 = arith.constant 0 : i32
    %c0_i32_0 = arith.constant 0 : i32
    %c0_i32_1 = arith.constant 0 : i32
    return %c0_i32, %c0_i32_0 : i32, i32
  }
  func.func @transform_5(%arg0: i32) -> (i32, i32) {
    %c0_i32 = arith.constant 0 : i32
    %c0_i32_0 = arith.constant 0 : i32
    %c0_i32_1 = arith.constant 0 : i32
    return %c0_i32, %c0_i32_0 : i32, i32
  }
  func.func @transform_6(%arg0: i32) -> (i32, i32) {
    %c0_i32 = arith.constant 0 : i32
    %c0_i32_0 = arith.constant 0 : i32
    %c0_i32_1 = arith.constant 0 : i32
    return %c0_i32, %c0_i32_0 : i32, i32
  }
  func.func @transform_7(%arg0: i32) -> (i32, i32) {
    %c0_i32 = arith.constant 0 : i32
    %c0_i32_0 = arith.constant 0 : i32
    %c0_i32_1 = arith.constant 0 : i32
    return %c0_i32, %c0_i32_0 : i32, i32
  }
}

</mosaic_0001>

<llo_original>
// kernel: tpu_custom_call.1
$region0: #{tpu_custom_call.1}
  #allocation0 [shape = 'u32[]', space=smem, size = 0x4, offset = 0x4, fixed_abs, tag = 'smem constant byte address 0x4 - core index']
  #allocation1 [shape = 'u32[144,128]{1,0:T(1,128)}', space=vmem, size = 0x12000, scoped, tag = 'internal scratch']
  #allocation2 [shape = 'f32[1]{0:T(128)S(6)}', space=smem, size = 0x200, scoped, tag = 'scoped memory for tpu_custom_call.1']
  %s0 = inlined_call_operand.hbm [shape: f32[8,256], index: 0, kind: input, shape index: {}]
  %s1 = inlined_call_operand.hbm [shape: f32[512,256], index: 1, kind: input, shape index: {}]
  %s2 = inlined_call_operand.<no memory space> [shape: f32[1], index: 2, kind: input, shape index: {}]
  %s3 = inlined_call_operand.vmem [shape: f32[4,4], index: 3, kind: input, shape index: {}]
  %s4 = inlined_call_operand.vmem [shape: f32[1,4], index: 4, kind: input, shape index: {}]
  %s5 = inlined_call_operand.vmem [shape: f32[4,4], index: 5, kind: input, shape index: {}]
  %s6 = inlined_call_operand.vmem [shape: f32[4,1], index: 6, kind: input, shape index: {}]
  %s7 = inlined_call_operand.hbm [shape: f32[8,256], index: 7, kind: output, shape index: {}]
  %s8 = sld [smem:[#allocation0]]
  $region46: #{tpu_custom_call.1} parent=0
    _
  %s10 = ssub.s32 1, %s8
  %s11 = scalar_select 0, %s10, %s8
  %12 = sst [smem:[#allocation2]] %s2
  $region1: #{tpu_custom_call.1} parent=0
    #allocation3 [shape = 'u8[8192]{0}', space=vmem, size = 0x2000, scoped, tag = 'input window, operand 0, single buffered']
    #allocation4 [shape = 's32[1]{0}', space=sflag, size = 0x4, scoped, tag = 'scoped memory for tpu_custom_call.1']
    #allocation5 [shape = 's32[1]{0}', space=sflag, size = 0x4, scoped, tag = 'scoped memory for tpu_custom_call.1']
    #allocation6 [shape = 'u8[524288]{0}', space=vmem, size = 0x80000, scoped, tag = 'input window, operand 1, single buffered']
    #allocation7 [shape = 's32[1]{0}', space=sflag, size = 0x4, scoped, tag = 'scoped memory for tpu_custom_call.1']
    #allocation8 [shape = 'u8[8192]{0}', space=vmem, size = 0x2000, scoped, tag = 'output window, operand 0, single buffered']
    %13 = vsyncpa [#allocation4], 0
    %14 = vsyncpa [#allocation7], 0
    %15 = vsyncpa [#allocation5], 0
    // Predicated region
    $region2: #{tpu_custom_call.1} parent=1 // pred_check
      _
    $region3: #{tpu_custom_call.1} parent=1 // pred_check_branch
      %17 = sbr.rel (0) target = $region5
    $region4: #{tpu_custom_call.1} parent=1 // pred_region
      %s19 = ssub.s32 256, 256
      %20 = vsyncadd [#allocation4], %s19
      %s22 = sshll.u32 [#allocation3], 4
      %s23 = int_to_ptr.vmem [resolvable:$true] %s22
      %25 = dma.hbm_to_vmem [thread:$0]  %s0, 256, %s23, [#allocation4]
    $region5: #{tpu_custom_call.1} parent=1 // pred_fallthru
      _
    // Predicated region
    $region6: #{tpu_custom_call.1} parent=1 // pred_check
      _
    $region7: #{tpu_custom_call.1} parent=1 // pred_check_branch
      %27 = sbr.rel (0) target = $region9
    $region8: #{tpu_custom_call.1} parent=1 // pred_region
      %s29 = ssub.s32 16384, 16384
      %30 = vsyncadd [#allocation7], %s29
      %s31 = sshll.u32 [#allocation6], 4
      %s32 = int_to_ptr.vmem [resolvable:$true] %s31
      %37 = dma.hbm_to_vmem [thread:$0]  %s1, 16384, %s32, [#allocation7], 256, 256, 16
    $region9: #{tpu_custom_call.1} parent=1 // pred_fallthru
      _
    // Predicated region
    $region10: #{tpu_custom_call.1} parent=1 // pred_check
      _
    $region11: #{tpu_custom_call.1} parent=1 // pred_check_branch
      %39 = sbr.rel (0) target = $region13
    $region12: #{tpu_custom_call.1} parent=1 // pred_region
      _
    $region13: #{tpu_custom_call.1} parent=1 // pred_fallthru
      _
    // Predicated region
    $region14: #{tpu_custom_call.1} parent=1 // pred_check
      _
    $region15: #{tpu_custom_call.1} parent=1 // pred_check_branch
      %41 = sbr.rel (0) target = $region17
    $region16: #{tpu_custom_call.1} parent=1 // pred_region
      _
    $region17: #{tpu_custom_call.1} parent=1 // pred_fallthru
      _
    // Predicated region
    $region18: #{tpu_custom_call.1} parent=1 // pred_check
      _
    $region19: #{tpu_custom_call.1} parent=1 // pred_check_branch
      %43 = sbr.rel (0) target = $region21
    $region20: #{tpu_custom_call.1} parent=1 // pred_region
      _
    $region21: #{tpu_custom_call.1} parent=1 // pred_fallthru
      _
    // Predicated region
    $region22: #{tpu_custom_call.1} parent=1 // pred_check
      _
    $region23: #{tpu_custom_call.1} parent=1 // pred_check_branch
      %45 = sbr.rel (0) target = $region25
    $region24: #{tpu_custom_call.1} parent=1 // pred_region
      _
    $region25: #{tpu_custom_call.1} parent=1 // pred_fallthru
      _
    // Predicated region
    $region26: #{tpu_custom_call.1} parent=1 // pred_check
      _
    $region27: #{tpu_custom_call.1} parent=1 // pred_check_branch
      %47 = sbr.rel (0) target = $region29
    $region28: #{tpu_custom_call.1} parent=1 // pred_region
      _
    $region29: #{tpu_custom_call.1} parent=1 // pred_fallthru
      _
    // Predicated region
    $region30: #{tpu_custom_call.1} parent=1 // pred_check
      _
    $region31: #{tpu_custom_call.1} parent=1 // pred_check_branch
      %49 = sbr.rel (0) target = $region33
    $region32: #{tpu_custom_call.1} parent=1 // pred_region
      %50 = dma.done [#allocation4], 256
    $region33: #{tpu_custom_call.1} parent=1 // pred_fallthru
      _
    // Predicated region
    $region34: #{tpu_custom_call.1} parent=1 // pred_check
      _
    $region35: #{tpu_custom_call.1} parent=1 // pred_check_branch
      %52 = sbr.rel (0) target = $region37
    $region36: #{tpu_custom_call.1} parent=1 // pred_region
      %53 = dma.done [#allocation7], 16384
    $region37: #{tpu_custom_call.1} parent=1 // pred_fallthru
      _
    %v54 = vld [vmem:[#allocation3] sm:$0xff]
    %v55 = vld [vmem:[#allocation3 + $0x8] sm:$0xff]
    %vm56 = vcmask 1043456
    %v57 = vsel %vm56, %v54, 0.0
    %v58 = vrot.slane %v57, 4
    %v59 = vadd.f32 %v57, %v58
    %v60 = vrot.slane %v59, 2
    %v61 = vadd.f32 %v59, %v60
    %v62 = vrot.slane %v61, 1
    %v63 = vadd.f32 %v61, %v62
    %v64 = vsel %vm56, %v55, 0.0
    %v65 = vrot.slane %v64, 4
    %v66 = vadd.f32 %v64, %v65
    %v67 = vrot.slane %v66, 2
    %v68 = vadd.f32 %v66, %v67
    %v69 = vrot.slane %v68, 1
    %v70 = vadd.f32 %v68, %v69
    %v71 = vrcp.pop 4.0
    %v72 = vmul.f32 %v63, %v71
    %v73 = vmul.f32 %v70, %v71
    %v74 = vsel %vm56, %v54, -inf
    %v75 = vrot.slane %v74, 4
    %v76 = vmax.f32 %v74, %v75
    %v77 = vrot.slane %v76, 2
    %v78 = vmax.f32 %v76, %v77
    %v79 = vrot.slane %v78, 1
    %v80 = vmax.f32 %v78, %v79
    %v81 = vsel %vm56, %v55, -inf
    %v82 = vrot.slane %v81, 4
    %v83 = vmax.f32 %v81, %v82
    %v84 = vrot.slane %v83, 2
    %v85 = vmax.f32 %v83, %v84
    %v86 = vrot.slane %v85, 1
    %v87 = vmax.f32 %v85, %v86
    %v90 = vrot.slane %v54, 4
    %v91 = vrot.slane %v55, 4
    %v94 = vsel %vm56, %v90, 0.0
    %v95 = vrot.slane %v94, 4
    %v96 = vadd.f32 %v94, %v95
    %v97 = vrot.slane %v96, 2
    %v98 = vadd.f32 %v96, %v97
    %v99 = vrot.slane %v98, 1
    %v100 = vadd.f32 %v98, %v99
    %v101 = vsel %vm56, %v91, 0.0
    %v102 = vrot.slane %v101, 4
    %v103 = vadd.f32 %v101, %v102
    %v104 = vrot.slane %v103, 2
    %v105 = vadd.f32 %v103, %v104
    %v106 = vrot.slane %v105, 1
    %v107 = vadd.f32 %v105, %v106
    %v108 = vmul.f32 %v100, %v71
    %v109 = vmul.f32 %v107, %v71
    %vm110 = vcmask 1047556
    %v111 = vsel %vm110, %v54, -inf
    %v112 = vrot.slane %v111, 4
    %v113 = vmax.f32 %v111, %v112
    %v114 = vrot.slane %v113, 2
    %v115 = vmax.f32 %v113, %v114
    %v116 = vrot.slane %v115, 1
    %v117 = vmax.f32 %v115, %v116
    %v118 = vsel %vm110, %v55, -inf
    %v119 = vrot.slane %v118, 4
    %v120 = vmax.f32 %v118, %v119
    %v121 = vrot.slane %v120, 2
    %v122 = vmax.f32 %v120, %v121
    %v123 = vrot.slane %v122, 1
    %v124 = vmax.f32 %v122, %v123
    %v129 = vrot.slane %v108, 7
    %v130 = vrot.slane %v109, 7
    %v131 = vrot.slane %v117, 7
    %v132 = vrot.slane %v124, 7
    %vm137 = vcmask 1040384
    %v138 = vsel %vm137, %v72, %v129
    %v139 = vsel %vm137, %v73, %v130
    %v140 = vsel %vm137, %v80, %v131
    %v141 = vsel %vm137, %v87, %v132
    %v142 = vld [vmem:[#allocation6] sm:$0xff]
    %v143 = vld [vmem:[#allocation6 + $0x8] sm:$0xff]
    %v144 = vld [vmem:[#allocation6 + $0x10] sm:$0xff]
    %v145 = vld [vmem:[#allocation6 + $0x18] sm:$0xff]
    %v146 = vld [vmem:[#allocation6 + $0x20] sm:$0xff]
    %v147 = vld [vmem:[#allocation6 + $0x28] sm:$0xff]
    %v148 = vld [vmem:[#allocation6 + $0x30] sm:$0xff]
    %v149 = vld [vmem:[#allocation6 + $0x38] sm:$0xff]
    %v150 = vld [vmem:[#allocation6 + $0x40] sm:$0xff]
    %v151 = vld [vmem:[#allocation6 + $0x48] sm:$0xff]
    %v152 = vld [vmem:[#allocation6 + $0x50] sm:$0xff]
    %v153 = vld [vmem:[#allocation6 + $0x58] sm:$0xff]
    %v154 = vld [vmem:[#allocation6 + $0x60] sm:$0xff]
    %v155 = vld [vmem:[#allocation6 + $0x68] sm:$0xff]
    %v156 = vld [vmem:[#allocation6 + $0x70] sm:$0xff]
    %v157 = vld [vmem:[#allocation6 + $0x78] sm:$0xff]
    %v158 = vld [vmem:[#allocation6 + $0x80] sm:$0xff]
    %v159 = vld [vmem:[#allocation6 + $0x88] sm:$0xff]
    %v160 = vld [vmem:[#allocation6 + $0x90] sm:$0xff]
    %v161 = vld [vmem:[#allocation6 + $0x98] sm:$0xff]
    %v162 = vld [vmem:[#allocation6 + $0xa0] sm:$0xff]
    %v163 = vld [vmem:[#allocation6 + $0xa8] sm:$0xff]
    %v164 = vld [vmem:[#allocation6 + $0xb0] sm:$0xff]
    %v165 = vld [vmem:[#allocation6 + $0xb8] sm:$0xff]
    %v166 = vld [vmem:[#allocation6 + $0xc0] sm:$0xff]
    %v167 = vld [vmem:[#allocation6 + $0xc8] sm:$0xff]
    %v168 = vld [vmem:[#allocation6 + $0xd0] sm:$0xff]
    %v169 = vld [vmem:[#allocation6 + $0xd8] sm:$0xff]
    %v170 = vld [vmem:[#allocation6 + $0xe0] sm:$0xff]
    %v171 = vld [vmem:[#allocation6 + $0xe8] sm:$0xff]
    %v172 = vld [vmem:[#allocation6 + $0xf0] sm:$0xff]
    %v173 = vld [vmem:[#allocation6 + $0xf8] sm:$0xff]
    %v174 = vld [vmem:[#allocation6 + $0x100] sm:$0xff]
    %v175 = vld [vmem:[#allocation6 + $0x108] sm:$0xff]
    %v176 = vld [vmem:[#allocation6 + $0x110] sm:$0xff]
    %v177 = vld [vmem:[#allocation6 + $0x118] sm:$0xff]
    %v178 = vld [vmem:[#allocation6 + $0x120] sm:$0xff]
    %v179 = vld [vmem:[#allocation6 + $0x128] sm:$0xff]
    %v180 = vld [vmem:[#allocation6 + $0x130] sm:$0xff]
    %v181 = vld [vmem:[#allocation6 + $0x138] sm:$0xff]
    %v182 = vld [vmem:[#allocation6 + $0x140] sm:$0xff]
    %v183 = vld [vmem:[#allocation6 + $0x148] sm:$0xff]
    %v184 = vld [vmem:[#allocation6 + $0x150] sm:$0xff]
    %v185 = vld [vmem:[#allocation6 + $0x158] sm:$0xff]
    %v186 = vld [vmem:[#allocation6 + $0x160] sm:$0xff]
    %v187 = vld [vmem:[#allocation6 + $0x168] sm:$0xff]
    %v188 = vld [vmem:[#allocation6 + $0x170] sm:$0xff]
    %v189 = vld [vmem:[#allocation6 + $0x178] sm:$0xff]
    %v190 = vld [vmem:[#allocation6 + $0x180] sm:$0xff]
    %v191 = vld [vmem:[#allocation6 + $0x188] sm:$0xff]
    %v192 = vld [vmem:[#allocation6 + $0x190] sm:$0xff]
    %v193 = vld [vmem:[#allocation6 + $0x198] sm:$0xff]
    %v194 = vld [vmem:[#allocation6 + $0x1a0] sm:$0xff]
    %v195 = vld [vmem:[#allocation6 + $0x1a8] sm:$0xff]
    %v196 = vld [vmem:[#allocation6 + $0x1b0] sm:$0xff]
    %v197 = vld [vmem:[#allocation6 + $0x1b8] sm:$0xff]
    %v198 = vld [vmem:[#allocation6 + $0x1c0] sm:$0xff]
    %v199 = vld [vmem:[#allocation6 + $0x1c8] sm:$0xff]
    %v200 = vld [vmem:[#allocation6 + $0x1d0] sm:$0xff]
    %v201 = vld [vmem:[#allocation6 + $0x1d8] sm:$0xff]
    %v202 = vld [vmem:[#allocation6 + $0x1e0] sm:$0xff]
    %v203 = vld [vmem:[#allocation6 + $0x1e8] sm:$0xff]
    %v204 = vld [vmem:[#allocation6 + $0x1f0] sm:$0xff]
    %v205 = vld [vmem:[#allocation6 + $0x1f8] sm:$0xff]
    %v206 = vld [vmem:[#allocation6 + $0x200] sm:$0xff]
    %v207 = vld [vmem:[#allocation6 + $0x208] sm:$0xff]
    %v208 = vld [vmem:[#allocation6 + $0x210] sm:$0xff]
    %v209 = vld [vmem:[#allocation6 + $0x218] sm:$0xff]
    %v210 = vld [vmem:[#allocation6 + $0x220] sm:$0xff]
    %v211 = vld [vmem:[#allocation6 + $0x228] sm:$0xff]
    %v212 = vld [vmem:[#allocation6 + $0x230] sm:$0xff]
    %v213 = vld [vmem:[#allocation6 + $0x238] sm:$0xff]
    %v214 = vld [vmem:[#allocation6 + $0x240] sm:$0xff]
    %v215 = vld [vmem:[#allocation6 + $0x248] sm:$0xff]
    %v216 = vld [vmem:[#allocation6 + $0x250] sm:$0xff]
    %v217 = vld [vmem:[#allocation6 + $0x258] sm:$0xff]
    %v218 = vld [vmem:[#allocation6 + $0x260] sm:$0xff]
    %v219 = vld [vmem:[#allocation6 + $0x268] sm:$0xff]
    %v220 = vld [vmem:[#allocation6 + $0x270] sm:$0xff]
    %v221 = vld [vmem:[#allocation6 + $0x278] sm:$0xff]
    %v222 = vld [vmem:[#allocation6 + $0x280] sm:$0xff]
    %v223 = vld [vmem:[#allocation6 + $0x288] sm:$0xff]
    %v224 = vld [vmem:[#allocation6 + $0x290] sm:$0xff]
    %v225 = vld [vmem:[#allocation6 + $0x298] sm:$0xff]
    %v226 = vld [vmem:[#allocation6 + $0x2a0] sm:$0xff]
    %v227 = vld [vmem:[#allocation6 + $0x2a8] sm:$0xff]
    %v228 = vld [vmem:[#allocation6 + $0x2b0] sm:$0xff]
    %v229 = vld [vmem:[#allocation6 + $0x2b8] sm:$0xff]
    %v230 = vld [vmem:[#allocation6 + $0x2c0] sm:$0xff]
    %v231 = vld [vmem:[#allocation6 + $0x2c8] sm:$0xff]
    %v232 = vld [vmem:[#allocation6 + $0x2d0] sm:$0xff]
    %v233 = vld [vmem:[#allocation6 + $0x2d8] sm:$0xff]
    %v234 = vld [vmem:[#allocation6 + $0x2e0] sm:$0xff]
    %v235 = vld [vmem:[#allocation6 + $0x2e8] sm:$0xff]
    %v236 = vld [vmem:[#allocation6 + $0x2f0] sm:$0xff]
    %v237 = vld [vmem:[#allocation6 + $0x2f8] sm:$0xff]
    %v238 = vld [vmem:[#allocation6 + $0x300] sm:$0xff]
    %v239 = vld [vmem:[#allocation6 + $0x308] sm:$0xff]
    %v240 = vld [vmem:[#allocation6 + $0x310] sm:$0xff]
    %v241 = vld [vmem:[#allocation6 + $0x318] sm:$0xff]
    %v242 = vld [vmem:[#allocation6 + $0x320] sm:$0xff]
    %v243 = vld [vmem:[#allocation6 + $0x328] sm:$0xff]
    %v244 = vld [vmem:[#allocation6 + $0x330] sm:$0xff]
    %v245 = vld [vmem:[#allocation6 + $0x338] sm:$0xff]
    %v246 = vld [vmem:[#allocation6 + $0x340] sm:$0xff]
    %v247 = vld [vmem:[#allocation6 + $0x348] sm:$0xff]
    %v248 = vld [vmem:[#allocation6 + $0x350] sm:$0xff]
    %v249 = vld [vmem:[#allocation6 + $0x358] sm:$0xff]
    %v250 = vld [vmem:[#allocation6 + $0x360] sm:$0xff]
    %v251 = vld [vmem:[#allocation6 + $0x368] sm:$0xff]
    %v252 = vld [vmem:[#allocation6 + $0x370] sm:$0xff]
    %v253 = vld [vmem:[#allocation6 + $0x378] sm:$0xff]
    %v254 = vld [vmem:[#allocation6 + $0x380] sm:$0xff]
    %v255 = vld [vmem:[#allocation6 + $0x388] sm:$0xff]
    %v256 = vld [vmem:[#allocation6 + $0x390] sm:$0xff]
    %v257 = vld [vmem:[#allocation6 + $0x398] sm:$0xff]
    %v258 = vld [vmem:[#allocation6 + $0x3a0] sm:$0xff]
    %v259 = vld [vmem:[#allocation6 + $0x3a8] sm:$0xff]
    %v260 = vld [vmem:[#allocation6 + $0x3b0] sm:$0xff]
    %v261 = vld [vmem:[#allocation6 + $0x3b8] sm:$0xff]
    %v262 = vld [vmem:[#allocation6 + $0x3c0] sm:$0xff]
    %v263 = vld [vmem:[#allocation6 + $0x3c8] sm:$0xff]
    %v264 = vld [vmem:[#allocation6 + $0x3d0] sm:$0xff]
    %v265 = vld [vmem:[#allocation6 + $0x3d8] sm:$0xff]
    %v266 = vld [vmem:[#allocation6 + $0x3e0] sm:$0xff]
    %v267 = vld [vmem:[#allocation6 + $0x3e8] sm:$0xff]
    %v268 = vld [vmem:[#allocation6 + $0x3f0] sm:$0xff]
    %v269 = vld [vmem:[#allocation6 + $0x3f8] sm:$0xff]
    %s270 = sld [smem:[#allocation2]]
    %v271 = vstv %s270
    %272 = vmatprep.subr.mxu0 %v173
    %273 = vmatpush1.msra.mxu0 %v172
    %274 = vmatprep.subr.mxu0 %v171
    %275 = vmatpush1.msra.mxu0 %v170
    %276 = vmatprep.subr.mxu0 %v169
    %277 = vmatpush1.msra.mxu0 %v168
    %278 = vmatprep.subr.mxu0 %v167
    %279 = vmatpush1.msra.mxu0 %v166
    %280 = vmatprep.subr.mxu0 %v165
    %281 = vmatpush1.msra.mxu0 %v164
    %282 = vmatprep.subr.mxu0 %v163
    %283 = vmatpush1.msra.mxu0 %v162
    %284 = vmatprep.subr.mxu0 %v161
    %285 = vmatpush1.msra.mxu0 %v160
    %286 = vmatprep.subr.mxu0 %v159
    %287 = vmatpush1.msra.mxu0 %v158
    %288 = vmatprep.subr.mxu0 %v157
    %289 = vmatpush1.msra.mxu0 %v156
    %290 = vmatprep.subr.mxu0 %v155
    %291 = vmatpush1.msra.mxu0 %v154
    %292 = vmatprep.subr.mxu0 %v153
    %293 = vmatpush1.msra.mxu0 %v152
    %294 = vmatprep.subr.mxu0 %v151
    %295 = vmatpush1.msra.mxu0 %v150
    %296 = vmatprep.subr.mxu0 %v149
    %297 = vmatpush1.msra.mxu0 %v148
    %298 = vmatprep.subr.mxu0 %v147
    %299 = vmatpush1.msra.mxu0 %v146
    %300 = vmatprep.subr.mxu0 %v145
    %301 = vmatpush1.msra.mxu0 %v144
    %302 = vmatprep.subr.mxu0 %v143
    %303 = vmatpush1.msra.mxu0 %v142
    %304 = vmatprep.subr.mxu0 %v205
    %305 = vmatpush2.msra.mxu0 %v204
    %306 = vmatprep.subr.mxu0 %v203
    %307 = vmatpush2.msra.mxu0 %v202
    %308 = vmatprep.subr.mxu0 %v201
    %309 = vmatpush2.msra.mxu0 %v200
    %310 = vmatprep.subr.mxu0 %v199
    %311 = vmatpush2.msra.mxu0 %v198
    %312 = vmatprep.subr.mxu0 %v197
    %313 = vmatpush2.msra.mxu0 %v196
    %314 = vmatprep.subr.mxu0 %v195
    %315 = vmatpush2.msra.mxu0 %v194
    %316 = vmatprep.subr.mxu0 %v193
    %317 = vmatpush2.msra.mxu0 %v192
    %318 = vmatprep.subr.mxu0 %v191
    %319 = vmatpush2.msra.mxu0 %v190
    %320 = vmatprep.subr.mxu0 %v189
    %321 = vmatpush2.msra.mxu0 %v188
    %322 = vmatprep.subr.mxu0 %v187
    %323 = vmatpush2.msra.mxu0 %v186
    %324 = vmatprep.subr.mxu0 %v185
    %325 = vmatpush2.msra.mxu0 %v184
    %326 = vmatprep.subr.mxu0 %v183
    %327 = vmatpush2.msra.mxu0 %v182
    %328 = vmatprep.subr.mxu0 %v181
    %329 = vmatpush2.msra.mxu0 %v180
    %330 = vmatprep.subr.mxu0 %v179
    %331 = vmatpush2.msra.mxu0 %v178
    %332 = vmatprep.subr.mxu0 %v177
    %333 = vmatpush2.msra.mxu0 %v176
    %334 = vmatprep.subr.mxu0 %v175
    %335 = vmatpush2.msra.mxu0 %v174
    %336 = vmatprep.mubr.f32.mxu0 %v139
    %337 = vmatmul.mubr.f32.gmra.mxu0 %v138
    %v338 = vpop.f32.mrf.mxu0
    %v339 = vadd.f32 %v271, %v338
    %v340 = vpop.f32.mrf.mxu0
    %v341 = vadd.f32 %v271, %v340
    %342 = vdwg.mxu0
    %343 = vmatprep.subr.mxu0 %v237
    %344 = vmatpush1.msra.mxu0 %v236
    %345 = vmatprep.subr.mxu0 %v235
    %346 = vmatpush1.msra.mxu0 %v234
    %347 = vmatprep.subr.mxu0 %v233
    %348 = vmatpush1.msra.mxu0 %v232
    %349 = vmatprep.subr.mxu0 %v231
    %350 = vmatpush1.msra.mxu0 %v230
    %351 = vmatprep.subr.mxu0 %v229
    %352 = vmatpush1.msra.mxu0 %v228
    %353 = vmatprep.subr.mxu0 %v227
    %354 = vmatpush1.msra.mxu0 %v226
    %355 = vmatprep.subr.mxu0 %v225
    %356 = vmatpush1.msra.mxu0 %v224
    %357 = vmatprep.subr.mxu0 %v223
    %358 = vmatpush1.msra.mxu0 %v222
    %359 = vmatprep.subr.mxu0 %v221
    %360 = vmatpush1.msra.mxu0 %v220
    %361 = vmatprep.subr.mxu0 %v219
    %362 = vmatpush1.msra.mxu0 %v218
    %363 = vmatprep.subr.mxu0 %v217
    %364 = vmatpush1.msra.mxu0 %v216
    %365 = vmatprep.subr.mxu0 %v215
    %366 = vmatpush1.msra.mxu0 %v214
    %367 = vmatprep.subr.mxu0 %v213
    %368 = vmatpush1.msra.mxu0 %v212
    %369 = vmatprep.subr.mxu0 %v211
    %370 = vmatpush1.msra.mxu0 %v210
    %371 = vmatprep.subr.mxu0 %v209
    %372 = vmatpush1.msra.mxu0 %v208
    %373 = vmatprep.subr.mxu0 %v207
    %374 = vmatpush1.msra.mxu0 %v206
    %375 = vmatprep.subr.mxu0 %v269
    %376 = vmatpush2.msra.mxu0 %v268
    %377 = vmatprep.subr.mxu0 %v267
    %378 = vmatpush2.msra.mxu0 %v266
    %379 = vmatprep.subr.mxu0 %v265
    %380 = vmatpush2.msra.mxu0 %v264
    %381 = vmatprep.subr.mxu0 %v263
    %382 = vmatpush2.msra.mxu0 %v262
    %383 = vmatprep.subr.mxu0 %v261
    %384 = vmatpush2.msra.mxu0 %v260
    %385 = vmatprep.subr.mxu0 %v259
    %386 = vmatpush2.msra.mxu0 %v258
    %387 = vmatprep.subr.mxu0 %v257
    %388 = vmatpush2.msra.mxu0 %v256
    %389 = vmatprep.subr.mxu0 %v255
    %390 = vmatpush2.msra.mxu0 %v254
    %391 = vmatprep.subr.mxu0 %v253
    %392 = vmatpush2.msra.mxu0 %v252
    %393 = vmatprep.subr.mxu0 %v251
    %394 = vmatpush2.msra.mxu0 %v250
    %395 = vmatprep.subr.mxu0 %v249
    %396 = vmatpush2.msra.mxu0 %v248
    %397 = vmatprep.subr.mxu0 %v247
    %398 = vmatpush2.msra.mxu0 %v246
    %399 = vmatprep.subr.mxu0 %v245
    %400 = vmatpush2.msra.mxu0 %v244
    %401 = vmatprep.subr.mxu0 %v243
    %402 = vmatpush2.msra.mxu0 %v242
    %403 = vmatprep.subr.mxu0 %v241
    %404 = vmatpush2.msra.mxu0 %v240
    %405 = vmatprep.subr.mxu0 %v239
    %406 = vmatpush2.msra.mxu0 %v238
    %407 = vmatprep.mubr.f32.mxu0 %v141
    %408 = vmatmul.mubr.f32.gmra.mxu0 %v140
    %v409 = vpop.f32.mrf.mxu0
    %v410 = vadd.f32 %v339, %v409
    %v411 = vpop.f32.mrf.mxu0
    %v412 = vadd.f32 %v341, %v411
    %413 = vdwg.mxu0
    %v414 = vxor.u32 %v410, 2147483648
    %v415 = vxor.u32 %v412, 2147483648
    %v416 = vmul.f32 %v414, 1.442695
    %v417 = vpow.pop %v416
    %v418 = vmul.f32 %v415, 1.442695
    %v419 = vpow.pop %v418
    %v420 = vadd.f32 %v417, 1.0
    %v421 = vadd.f32 %v419, 1.0
    %v422 = vrcp.pop %v420
    %v423 = vmul.f32 1.0, %v422
    %v424 = vrcp.pop %v421
    %v425 = vmul.f32 1.0, %v424
    %v426 = vadd.f32 %v54, %v55
    %427 = vadd.xlane.f32.xlu0 %v426
    %v428 = vpop.xlane.xlu0 %427
    %v429 = vrcp.pop 256.0
    %v430 = vmul.f32 %v428, %v429
    %v431 = vld [vmem:[%s3] sm:$0xf]
    %v432 = vld [vmem:[%s5] sm:$0xf]
    %v433 = vld [vmem:[%s4] sm:$0x1]
    %v434 = vld [vmem:[%s6] sm:$0xf]
    %v435 = vmul.f32 %v431, %v430
    %vm436 = vcmask 27648
    %v437 = vsel %vm436, %v435, 0.0
    %v438 = vrot.slane %v437, 4
    %v439 = vadd.f32 %v437, %v438
    %v440 = vrot.slane %v439, 2
    %v441 = vadd.f32 %v439, %v440
    %v442 = vrot.slane %v441, 1
    %v443 = vadd.f32 %v441, %v442
    %v444 = vadd.f32 %v443, %v433
    %v445 = vmax.f32 %v444, 0.0
    %v446 = vlaneseq
    %v447 = vshrl.u32 %v446, 7
    %v448 = vsub.s32 0, %v447
    %v449 = vrot.slane %v445, %v448
    %v450 = vmul.f32 %v432, %v449
    %v451 = vsel %vm436, %v450, 0.0
    %452 = vadd.xlane.f32.xlu0 %v451
    %v453 = vpop.xlane.xlu0 %452
    %v454 = vadd.f32 %v453, %v434
    %v455 = vxor.u32 %v454, 2147483648
    %v456 = vmul.f32 %v455, 1.442695
    %v457 = vpow.pop %v456
    %v458 = vadd.f32 %v457, 1.0
    %v459 = vrcp.pop %v458
    %v460 = vmul.f32 1.0, %v459
    %v461 = vadd.f32 %v423, 1.0
    %v462 = vadd.f32 %v425, 1.0
    %v463 = vlaneseq
    %v464 = vshrl.u32 %v463, 7
    %v465 = vsub.s32 0, %v464
    %v466 = vrot.slane %v461, %v465
    %v467 = vlaneseq
    %v468 = vshrl.u32 %v467, 7
    %v469 = vsub.s32 0, %v468
    %v470 = vrot.slane %v462, %v469
    %472 = vset.pattern.permute.xlu0 0
    %473 = vperm.xlu0 %472, %v460
    %v474 = vpop.permute.xlu0 %473
    %v476 = vadd.f32 %v466, %v474
    %v477 = vadd.f32 %v470, %v474
    %v479 = vrot.slane %v430, 4
    %v481 = vmul.f32 %v431, %v479
    %v482 = vsel %vm436, %v481, 0.0
    %v483 = vrot.slane %v482, 4
    %v484 = vadd.f32 %v482, %v483
    %v485 = vrot.slane %v484, 2
    %v486 = vadd.f32 %v484, %v485
    %v487 = vrot.slane %v486, 1
    %v488 = vadd.f32 %v486, %v487
    %v489 = vadd.f32 %v488, %v433
    %v490 = vmax.f32 %v489, 0.0
    %v491 = vlaneseq
    %v492 = vshrl.u32 %v491, 7
    %v493 = vsub.s32 0, %v492
    %v494 = vrot.slane %v490, %v493
    %v495 = vmul.f32 %v432, %v494
    %v496 = vsel %vm436, %v495, 0.0
    %497 = vadd.xlane.f32.xlu0 %v496
    %v498 = vpop.xlane.xlu0 %497
    %v499 = vadd.f32 %v498, %v434
    %v500 = vxor.u32 %v499, 2147483648
    %v501 = vmul.f32 %v500, 1.442695
    %v502 = vpow.pop %v501
    %v503 = vadd.f32 %v502, 1.0
    %v504 = vrcp.pop %v503
    %v505 = vmul.f32 1.0, %v504
    %v506 = vlaneseq
    %v507 = vshrl.u32 %v506, 7
    %v508 = vsub.s32 1, %v507
    %v509 = vrot.slane %v461, %v508
    %v510 = vlaneseq
    %v511 = vshrl.u32 %v510, 7
    %v512 = vsub.s32 1, %v511
    %v513 = vrot.slane %v462, %v512
    %515 = vset.pattern.permute.xlu0 0
    %516 = vperm.xlu0 %515, %v505
    %v517 = vpop.permute.xlu0 %516
    %v519 = vadd.f32 %v509, %v517
    %v520 = vadd.f32 %v513, %v517
    %v523 = vrot.slane %v519, 4
    %v524 = vrot.slane %v520, 4
    %v527 = vsel %vm56, %v476, %v523
    %v528 = vsel %vm56, %v477, %v524
    %v529 = vmul.f32 %v54, %v527
    %v530 = vmul.f32 %v55, %v528
    %v531 = vmax.f32 %v529, 0.0
    %v532 = vmax.f32 %v530, 0.0
    %533 = vst [vmem:[#allocation8] sm:$0xff] %v531
    %534 = vst [vmem:[#allocation8 + $0x8] sm:$0xff] %v532
    // Predicated region
    $region38: #{tpu_custom_call.1} parent=1 // pred_check
      _
    $region39: #{tpu_custom_call.1} parent=1 // pred_check_branch
      %536 = sbr.rel (0) target = $region41
    $region40: #{tpu_custom_call.1} parent=1 // pred_region
      %s538 = ssub.s32 256, 256
      %539 = vsyncadd [#allocation5], %s538
      %s541 = sshll.u32 [#allocation8], 4
      %s542 = int_to_ptr.vmem [resolvable:$true] %s541
      %544 = dma.vmem_to_hbm [thread:$0]  %s542, 256, %s7, [#allocation5]
    $region41: #{tpu_custom_call.1} parent=1 // pred_fallthru
      _
    // Predicated region
    $region42: #{tpu_custom_call.1} parent=1 // pred_check
      _
    $region43: #{tpu_custom_call.1} parent=1 // pred_check_branch
      %546 = sbr.rel (0) target = $region45
    $region44: #{tpu_custom_call.1} parent=1 // pred_region
      %547 = dma.done [#allocation5], 256
    $region45: #{tpu_custom_call.1} parent=1 // pred_fallthru
      _
    %548 = vsyncpa [#allocation4], 1
    %549 = vsyncpa [#allocation7], 1
    %550 = vsyncpa [#allocation5], 1

</llo_original>
